<compile_context>
chip_gen: v5e
topology: v5e:2x2
jax: 0.10.0
libtpu: 0.0.40
codegen_flags: <defaults>
</compile_context>

<pallas_src>
import jax
import jax.numpy as jnp
from jax import lax
from jax.experimental import pallas as pl
from jax.experimental.pallas import tpu as pltpu

_HIDDEN = 16
_LANE = 128
_TB_MAX = 8192


def _silu(v):
    # SiLU(x) = x * sigmoid(x);  sigmoid(x) = 0.5*(tanh(x/2)+1)  (exact identity,
    # one EUP tanh instead of exp + divide).
    return v * (0.5 * (jnp.tanh(0.5 * v) + 1.0))


def _policy_kernel(x_ref, w1_ref, wmid_ref, wlast_ref, b_ref, out_ref):
    """One batch tile.  x block is [tb, in_dim]; everything after layer 1 is
    feature-major [features, tb] so the 128-lane axis carries the batch."""
    out_dim = out_ref.shape[0]
    b = b_ref[...]                                       # [bmax, 6] bias slab

    # Layer 1: contract x's feature axis directly (A @ B.T form) -> [16, tb].
    h = lax.dot_general(
        w1_ref[...], x_ref[...],
        dimension_numbers=(((1,), (1,)), ((), ())),
        preferred_element_type=jnp.float32)
    h = _silu(h + b[:_HIDDEN, 0:1])

    # Layers 2..5, statically unrolled: [16, 16] @ [16, tb].
    for j in range(4):
        h = jnp.dot(wmid_ref[j], h, preferred_element_type=jnp.float32)
        h = _silu(h + b[:_HIDDEN, j + 1:j + 2])

    # Final layer: [out_dim, 16] @ [16, tb].
    logits = jnp.dot(wlast_ref[...], h, preferred_element_type=jnp.float32)
    logits = logits + b[:out_dim, 5:6]

    # Numerically stable softmax over the tiny feature axis, unrolled row-wise
    # (pure VPU max/add), with an EXACT reciprocal of the [1, tb] denominator
    # so rows sum to 1 within f32 rounding.
    m = logits[0:1, :]
    for r in range(1, out_dim):
        m = jnp.maximum(m, logits[r:r + 1, :])
    e = jnp.exp(logits - m)
    denom = e[0:1, :]
    for r in range(1, out_dim):
        denom = denom + e[r:r + 1, :]
    out_ref[...] = (e * (1.0 / denom)).astype(out_ref.dtype)


def pack_params(params):
    """Pack the 12 tiny parameter arrays into 4 consolidated operands.
    Call once and reuse; keeps packing off the latency-critical path."""
    out_dim = params[-1][0].shape[0]
    bmax = max(_HIDDEN, out_dim)
    w1 = jnp.asarray(params[0][0], jnp.float32)                       # [16, in_dim]
    wmid = jnp.stack([jnp.asarray(params[i][0], jnp.float32)
                      for i in range(1, 5)])                          # [4, 16, 16]
    wlast = jnp.asarray(params[5][0], jnp.float32)                    # [out_dim, 16]
    b_all = jnp.stack(
        [jnp.pad(jnp.asarray(b, jnp.float32), (0, bmax - b.shape[0]))
         for _, b in params], axis=1)                                 # [bmax, 6]
    return w1, wmid, wlast, b_all


def _choose_tb(batch):
    """Batch tile: whole batch when tiny; otherwise ~half the lane-padded batch
    (>= 2 grid steps so v7x's two TensorCores split the work), capped at
    _TB_MAX and kept a multiple of 128 for lane-dense blocks."""
    if batch <= _LANE:
        return batch
    n128 = -(-batch // _LANE)                  # number of 128-wide lane tiles
    half = (-(-n128 // 2)) * _LANE             # ~half the padded batch
    return min(_TB_MAX, half)


@jax.jit
def policy_ann_forward(x, packed):
    """x: [B, input_dim] float.  packed: result of pack_params(params)."""
    w1, wmid, wlast, b_all = packed
    batch, in_dim = x.shape
    out_dim = wlast.shape[0]
    x = x.astype(jnp.float32)

    tb = _choose_tb(batch)
    grid = (-(-batch // tb),)                  # partial last block handled by Pallas

    out_t = pl.pallas_call(
        _policy_kernel,
        out_shape=jax.ShapeDtypeStruct((out_dim, batch), jnp.float32),
        grid=grid,
        in_specs=[
            pl.BlockSpec((tb, in_dim), lambda i: (i, 0)),   # batch-tiled input
            pl.BlockSpec(w1.shape, lambda i: (0, 0)),       # weights stay resident
            pl.BlockSpec(wmid.shape, lambda i: (0, 0, 0)),
            pl.BlockSpec(wlast.shape, lambda i: (0, 0)),
            pl.BlockSpec(b_all.shape, lambda i: (0, 0)),
        ],
        out_specs=pl.BlockSpec((out_dim, tb), lambda i: (0, i)),
        compiler_params=pltpu.CompilerParams(
            dimension_semantics=("parallel",)),
    )(x, w1, wmid, wlast, b_all)

    return out_t.T                                          # [B, out_dim]


def init_params(key, input_dim, output_dim):
    """Deterministic init mimicking torch.nn.Linear (uniform +/- 1/sqrt(fan_in)).
    Weights kept in PyTorch layout W: [out, in], b: [out]."""
    dims = [(input_dim, _HIDDEN)] + [(_HIDDEN, _HIDDEN)] * 4 + [(_HIDDEN, output_dim)]
    params = []
    for fan_in, fan_out in dims:
        key, kw, kb = jax.random.split(key, 3)
        bound = 1.0 / float(fan_in) ** 0.5
        w = jax.random.uniform(kw, (fan_out, fan_in), jnp.float32, -bound, bound)
        b = jax.random.uniform(kb, (fan_out,), jnp.float32, -bound, bound)
        params.append((w, b))
    return params


def reference_forward(x, params):
    """Pure-JAX reference matching the PyTorch module semantics."""
    h = x
    for i, (w, b) in enumerate(params):
        h = h @ w.T + b
        if i < len(params) - 1:
            h = h * jax.nn.sigmoid(h)
    return jax.nn.softmax(h, axis=-1)


if __name__ == "__main__":
    input_dim, output_dim = 12, 4

    key = jax.random.PRNGKey(0)
    key, kp = jax.random.split(key)
    params = init_params(kp, input_dim, output_dim)
    packed = pack_params(params)          # pack once, outside the forward path

    # Small batch (module-scale) + a larger one that exercises the grid and a
    # partial (masked) last block.
    for batch in (8, 1100):
        key, kx = jax.random.split(key)
        x = jax.random.normal(kx, (batch, input_dim), jnp.float32)

        out = jax.block_until_ready(policy_ann_forward(x, packed))
        ref = reference_forward(x, params)

        assert out.shape == (batch, output_dim)
        assert bool(jnp.all(jnp.isfinite(out)))
        # Exact divide in the softmax -> rows sum to 1 within f32 rounding.
        assert jnp.allclose(jnp.sum(out, axis=-1), 1.0, atol=1e-3)
        assert jnp.allclose(out, ref, atol=1e-3, rtol=1e-3)

    print("KERNEL_OK")
</pallas_src>

<mosaic_0001>
module attributes {stable_mosaic.version = 11 : i64} {
  func.func @_policy_kernel(%arg0: i32, %arg1: memref<8x12xf32, #tpu.memory_space<vmem>>, %arg2: memref<16x12xf32, #tpu.memory_space<vmem>>, %arg3: memref<4x16x16xf32, #tpu.memory_space<vmem>>, %arg4: memref<4x16xf32, #tpu.memory_space<vmem>>, %arg5: memref<16x6xf32, #tpu.memory_space<vmem>>, %arg6: memref<4x8xf32, #tpu.memory_space<vmem>>) attributes {dimension_semantics = [#tpu.dimension_semantics<parallel>], iteration_bounds = array<i64: 1>, scalar_prefetch = 0 : i64, scratch_operands = 0 : i64, tpu.core_type = #tpu.core_type<tc>, window_params = [{transform_indices = @transform_0, window_bounds = array<i64: 8, 12>}, {pipeline_mode = #tpu.pipeline_mode<synchronous>, transform_indices = @transform_1, window_bounds = array<i64: 16, 12>}, {pipeline_mode = #tpu.pipeline_mode<synchronous>, transform_indices = @transform_2, window_bounds = array<i64: 4, 16, 16>}, {pipeline_mode = #tpu.pipeline_mode<synchronous>, transform_indices = @transform_3, window_bounds = array<i64: 4, 16>}, {pipeline_mode = #tpu.pipeline_mode<synchronous>, transform_indices = @transform_4, window_bounds = array<i64: 16, 6>}, {transform_indices = @transform_5, window_bounds = array<i64: 4, 8>}]} {
    %c0 = arith.constant 0 : index
    %c0_0 = arith.constant 0 : index
    %0 = vector.load %arg5[%c0, %c0_0] : memref<16x6xf32, #tpu.memory_space<vmem>>, vector<16x6xf32>
    %c0_1 = arith.constant 0 : index
    %c0_2 = arith.constant 0 : index
    %1 = vector.load %arg2[%c0_1, %c0_2] : memref<16x12xf32, #tpu.memory_space<vmem>>, vector<16x12xf32>
    %c0_3 = arith.constant 0 : index
    %c0_4 = arith.constant 0 : index
    %2 = vector.load %arg1[%c0_3, %c0_4] : memref<8x12xf32, #tpu.memory_space<vmem>>, vector<8x12xf32>
    %cst = arith.constant dense<0.000000e+00> : vector<16x8xf32>
    %3 = tpu.matmul %1, %2, %cst {dimension_numbers = #tpu.dot_dimension_numbers<[1], [1], [0], [0], [0, 0, 1, 0], [], []>} : vector<16x12xf32>, vector<8x12xf32>, vector<16x8xf32> -> vector<16x8xf32>
    %4 = vector.extract_strided_slice %0 {offsets = [0, 0], sizes = [16, 1], strides = [1, 1]} : vector<16x6xf32> to vector<16x1xf32>
    %5 = vector.broadcast %4 : vector<16x1xf32> to vector<16x8xf32>
    %6 = arith.addf %3, %5 : vector<16x8xf32>
    %cst_5 = arith.constant 5.000000e-01 : f32
    %7 = vector.broadcast %cst_5 : f32 to vector<16x8xf32>
    %8 = arith.mulf %7, %6 : vector<16x8xf32>
    %9 = math.tanh %8 : vector<16x8xf32>
    %cst_6 = arith.constant 1.000000e+00 : f32
    %10 = vector.broadcast %cst_6 : f32 to vector<16x8xf32>
    %11 = arith.addf %9, %10 : vector<16x8xf32>
    %cst_7 = arith.constant 5.000000e-01 : f32
    %12 = vector.broadcast %cst_7 : f32 to vector<16x8xf32>
    %13 = arith.mulf %12, %11 : vector<16x8xf32>
    %14 = arith.mulf %6, %13 : vector<16x8xf32>
    %c0_8 = arith.constant 0 : index
    %c0_9 = arith.constant 0 : index
    %c0_10 = arith.constant 0 : index
    %15 = vector.load %arg3[%c0_8, %c0_9, %c0_10] : memref<4x16x16xf32, #tpu.memory_space<vmem>>, vector<1x16x16xf32>
    %16 = vector.shape_cast %15 : vector<1x16x16xf32> to vector<16x16xf32>
    %cst_11 = arith.constant dense<0.000000e+00> : vector<16x8xf32>
    %17 = tpu.matmul %16, %14, %cst_11 {dimension_numbers = #tpu.dot_dimension_numbers<[1], [0], [0], [1], [0, 0, 1, 1], [], []>} : vector<16x16xf32>, vector<16x8xf32>, vector<16x8xf32> -> vector<16x8xf32>
    %18 = vector.extract_strided_slice %0 {offsets = [0, 1], sizes = [16, 1], strides = [1, 1]} : vector<16x6xf32> to vector<16x1xf32>
    %19 = vector.broadcast %18 : vector<16x1xf32> to vector<16x8xf32>
    %20 = arith.addf %17, %19 : vector<16x8xf32>
    %cst_12 = arith.constant 5.000000e-01 : f32
    %21 = vector.broadcast %cst_12 : f32 to vector<16x8xf32>
    %22 = arith.mulf %21, %20 : vector<16x8xf32>
    %23 = math.tanh %22 : vector<16x8xf32>
    %cst_13 = arith.constant 1.000000e+00 : f32
    %24 = vector.broadcast %cst_13 : f32 to vector<16x8xf32>
    %25 = arith.addf %23, %24 : vector<16x8xf32>
    %cst_14 = arith.constant 5.000000e-01 : f32
    %26 = vector.broadcast %cst_14 : f32 to vector<16x8xf32>
    %27 = arith.mulf %26, %25 : vector<16x8xf32>
    %28 = arith.mulf %20, %27 : vector<16x8xf32>
    %c1 = arith.constant 1 : index
    %c0_15 = arith.constant 0 : index
    %c0_16 = arith.constant 0 : index
    %29 = vector.load %arg3[%c1, %c0_15, %c0_16] : memref<4x16x16xf32, #tpu.memory_space<vmem>>, vector<1x16x16xf32>
    %30 = vector.shape_cast %29 : vector<1x16x16xf32> to vector<16x16xf32>
    %cst_17 = arith.constant dense<0.000000e+00> : vector<16x8xf32>
    %31 = tpu.matmul %30, %28, %cst_17 {dimension_numbers = #tpu.dot_dimension_numbers<[1], [0], [0], [1], [0, 0, 1, 1], [], []>} : vector<16x16xf32>, vector<16x8xf32>, vector<16x8xf32> -> vector<16x8xf32>
    %32 = vector.extract_strided_slice %0 {offsets = [0, 2], sizes = [16, 1], strides = [1, 1]} : vector<16x6xf32> to vector<16x1xf32>
    %33 = vector.broadcast %32 : vector<16x1xf32> to vector<16x8xf32>
    %34 = arith.addf %31, %33 : vector<16x8xf32>
    %cst_18 = arith.constant 5.000000e-01 : f32
    %35 = vector.broadcast %cst_18 : f32 to vector<16x8xf32>
    %36 = arith.mulf %35, %34 : vector<16x8xf32>
    %37 = math.tanh %36 : vector<16x8xf32>
    %cst_19 = arith.constant 1.000000e+00 : f32
    %38 = vector.broadcast %cst_19 : f32 to vector<16x8xf32>
    %39 = arith.addf %37, %38 : vector<16x8xf32>
    %cst_20 = arith.constant 5.000000e-01 : f32
    %40 = vector.broadcast %cst_20 : f32 to vector<16x8xf32>
    %41 = arith.mulf %40, %39 : vector<16x8xf32>
    %42 = arith.mulf %34, %41 : vector<16x8xf32>
    %c2 = arith.constant 2 : index
    %c0_21 = arith.constant 0 : index
    %c0_22 = arith.constant 0 : index
    %43 = vector.load %arg3[%c2, %c0_21, %c0_22] : memref<4x16x16xf32, #tpu.memory_space<vmem>>, vector<1x16x16xf32>
    %44 = vector.shape_cast %43 : vector<1x16x16xf32> to vector<16x16xf32>
    %cst_23 = arith.constant dense<0.000000e+00> : vector<16x8xf32>
    %45 = tpu.matmul %44, %42, %cst_23 {dimension_numbers = #tpu.dot_dimension_numbers<[1], [0], [0], [1], [0, 0, 1, 1], [], []>} : vector<16x16xf32>, vector<16x8xf32>, vector<16x8xf32> -> vector<16x8xf32>
    %46 = vector.extract_strided_slice %0 {offsets = [0, 3], sizes = [16, 1], strides = [1, 1]} : vector<16x6xf32> to vector<16x1xf32>
    %47 = vector.broadcast %46 : vector<16x1xf32> to vector<16x8xf32>
    %48 = arith.addf %45, %47 : vector<16x8xf32>
    %cst_24 = arith.constant 5.000000e-01 : f32
    %49 = vector.broadcast %cst_24 : f32 to vector<16x8xf32>
    %50 = arith.mulf %49, %48 : vector<16x8xf32>
    %51 = math.tanh %50 : vector<16x8xf32>
    %cst_25 = arith.constant 1.000000e+00 : f32
    %52 = vector.broadcast %cst_25 : f32 to vector<16x8xf32>
    %53 = arith.addf %51, %52 : vector<16x8xf32>
    %cst_26 = arith.constant 5.000000e-01 : f32
    %54 = vector.broadcast %cst_26 : f32 to vector<16x8xf32>
    %55 = arith.mulf %54, %53 : vector<16x8xf32>
    %56 = arith.mulf %48, %55 : vector<16x8xf32>
    %c3 = arith.constant 3 : index
    %c0_27 = arith.constant 0 : index
    %c0_28 = arith.constant 0 : index
    %57 = vector.load %arg3[%c3, %c0_27, %c0_28] : memref<4x16x16xf32, #tpu.memory_space<vmem>>, vector<1x16x16xf32>
    %58 = vector.shape_cast %57 : vector<1x16x16xf32> to vector<16x16xf32>
    %cst_29 = arith.constant dense<0.000000e+00> : vector<16x8xf32>
    %59 = tpu.matmul %58, %56, %cst_29 {dimension_numbers = #tpu.dot_dimension_numbers<[1], [0], [0], [1], [0, 0, 1, 1], [], []>} : vector<16x16xf32>, vector<16x8xf32>, vector<16x8xf32> -> vector<16x8xf32>
    %60 = vector.extract_strided_slice %0 {offsets = [0, 4], sizes = [16, 1], strides = [1, 1]} : vector<16x6xf32> to vector<16x1xf32>
    %61 = vector.broadcast %60 : vector<16x1xf32> to vector<16x8xf32>
    %62 = arith.addf %59, %61 : vector<16x8xf32>
    %cst_30 = arith.constant 5.000000e-01 : f32
    %63 = vector.broadcast %cst_30 : f32 to vector<16x8xf32>
    %64 = arith.mulf %63, %62 : vector<16x8xf32>
    %65 = math.tanh %64 : vector<16x8xf32>
    %cst_31 = arith.constant 1.000000e+00 : f32
    %66 = vector.broadcast %cst_31 : f32 to vector<16x8xf32>
    %67 = arith.addf %65, %66 : vector<16x8xf32>
    %cst_32 = arith.constant 5.000000e-01 : f32
    %68 = vector.broadcast %cst_32 : f32 to vector<16x8xf32>
    %69 = arith.mulf %68, %67 : vector<16x8xf32>
    %70 = arith.mulf %62, %69 : vector<16x8xf32>
    %c0_33 = arith.constant 0 : index
    %c0_34 = arith.constant 0 : index
    %71 = vector.load %arg4[%c0_33, %c0_34] : memref<4x16xf32, #tpu.memory_space<vmem>>, vector<4x16xf32>
    %cst_35 = arith.constant dense<0.000000e+00> : vector<4x8xf32>
    %72 = tpu.matmul %71, %70, %cst_35 {dimension_numbers = #tpu.dot_dimension_numbers<[1], [0], [0], [1], [0, 0, 1, 1], [], []>} : vector<4x16xf32>, vector<16x8xf32>, vector<4x8xf32> -> vector<4x8xf32>
    %73 = vector.extract_strided_slice %0 {offsets = [0, 5], sizes = [4, 1], strides = [1, 1]} : vector<16x6xf32> to vector<4x1xf32>
    %74 = vector.broadcast %73 : vector<4x1xf32> to vector<4x8xf32>
    %75 = arith.addf %72, %74 : vector<4x8xf32>
    %76 = vector.extract_strided_slice %75 {offsets = [0, 0], sizes = [1, 8], strides = [1, 1]} : vector<4x8xf32> to vector<1x8xf32>
    %77 = vector.extract_strided_slice %75 {offsets = [1, 0], sizes = [1, 8], strides = [1, 1]} : vector<4x8xf32> to vector<1x8xf32>
    %78 = arith.maximumf %76, %77 : vector<1x8xf32>
    %79 = vector.extract_strided_slice %75 {offsets = [2, 0], sizes = [1, 8], strides = [1, 1]} : vector<4x8xf32> to vector<1x8xf32>
    %80 = arith.maximumf %78, %79 : vector<1x8xf32>
    %81 = vector.extract_strided_slice %75 {offsets = [3, 0], sizes = [1, 8], strides = [1, 1]} : vector<4x8xf32> to vector<1x8xf32>
    %82 = arith.maximumf %80, %81 : vector<1x8xf32>
    %83 = vector.broadcast %82 : vector<1x8xf32> to vector<4x8xf32>
    %84 = arith.subf %75, %83 : vector<4x8xf32>
    %85 = math.exp %84 : vector<4x8xf32>
    %86 = vector.extract_strided_slice %85 {offsets = [0, 0], sizes = [1, 8], strides = [1, 1]} : vector<4x8xf32> to vector<1x8xf32>
    %87 = vector.extract_strided_slice %85 {offsets = [1, 0], sizes = [1, 8], strides = [1, 1]} : vector<4x8xf32> to vector<1x8xf32>
    %88 = arith.addf %86, %87 : vector<1x8xf32>
    %89 = vector.extract_strided_slice %85 {offsets = [2, 0], sizes = [1, 8], strides = [1, 1]} : vector<4x8xf32> to vector<1x8xf32>
    %90 = arith.addf %88, %89 : vector<1x8xf32>
    %91 = vector.extract_strided_slice %85 {offsets = [3, 0], sizes = [1, 8], strides = [1, 1]} : vector<4x8xf32> to vector<1x8xf32>
    %92 = arith.addf %90, %91 : vector<1x8xf32>
    %cst_36 = arith.constant 1.000000e+00 : f32
    %93 = vector.broadcast %cst_36 : f32 to vector<1x8xf32>
    %94 = arith.divf %93, %92 : vector<1x8xf32>
    %95 = vector.broadcast %94 : vector<1x8xf32> to vector<4x8xf32>
    %96 = arith.mulf %85, %95 : vector<4x8xf32>
    %c0_37 = arith.constant 0 : index
    %c0_38 = arith.constant 0 : index
    %97 = vector.load %arg6[%c0_37, %c0_38] : memref<4x8xf32, #tpu.memory_space<vmem>>, vector<4x8xf32>
    tpu.vector_store %arg6[%c0_37, %c0_38], %96 {strides = array<i32>} : memref<4x8xf32, #tpu.memory_space<vmem>>, vector<4x8xf32>,
    return
  }
  func.func @transform_0(%arg0: i32) -> (i32, i32) {
    %c0_i32 = arith.constant 0 : i32
    %c0_i32_0 = arith.constant 0 : i32
    return %arg0, %c0_i32 : i32, i32
  }
  func.func @transform_1(%arg0: i32) -> (i32, i32) {
    %c0_i32 = arith.constant 0 : i32
    %c0_i32_0 = arith.constant 0 : i32
    %c0_i32_1 = arith.constant 0 : i32
    return %c0_i32, %c0_i32_0 : i32, i32
  }
  func.func @transform_2(%arg0: i32) -> (i32, i32, i32) {
    %c0_i32 = arith.constant 0 : i32
    %c0_i32_0 = arith.constant 0 : i32
    %c0_i32_1 = arith.constant 0 : i32
    %c0_i32_2 = arith.constant 0 : i32
    return %c0_i32, %c0_i32_0, %c0_i32_1 : i32, i32, i32
  }
  func.func @transform_3(%arg0: i32) -> (i32, i32) {
    %c0_i32 = arith.constant 0 : i32
    %c0_i32_0 = arith.constant 0 : i32
    %c0_i32_1 = arith.constant 0 : i32
    return %c0_i32, %c0_i32_0 : i32, i32
  }
  func.func @transform_4(%arg0: i32) -> (i32, i32) {
    %c0_i32 = arith.constant 0 : i32
    %c0_i32_0 = arith.constant 0 : i32
    %c0_i32_1 = arith.constant 0 : i32
    return %c0_i32, %c0_i32_0 : i32, i32
  }
  func.func @transform_5(%arg0: i32) -> (i32, i32) {
    %c0_i32 = arith.constant 0 : i32
    %c0_i32_0 = arith.constant 0 : i32
    return %c0_i32, %arg0 : i32, i32
  }
}

</mosaic_0001>

<llo_original>
// kernel: policy_ann_forward.1
$region0: #{policy_ann_forward.1}
  #allocation0 [shape = 'u32[]', space=smem, size = 0x4, offset = 0x4, fixed_abs, tag = 'smem constant byte address 0x4 - core index']
  #allocation1 [shape = 'u32[72,128]{1,0:T(1,128)}', space=vmem, size = 0x9000, scoped, tag = 'internal scratch']
  %s0 = inlined_call_operand.vmem [shape: f32[8,12], index: 0, kind: input, shape index: {}]
  %s1 = inlined_call_operand.vmem [shape: f32[16,12], index: 1, kind: input, shape index: {}]
  %s2 = inlined_call_operand.hbm [shape: f32[4,16,16], index: 2, kind: input, shape index: {}]
  %s3 = inlined_call_operand.hbm [shape: f32[4,16], index: 3, kind: input, shape index: {}]
  %s4 = inlined_call_operand.vmem [shape: f32[16,6], index: 4, kind: input, shape index: {}]
  %s5 = inlined_call_operand.hbm [shape: f32[4,8], index: 5, kind: output, shape index: {}]
  %s6 = sld [smem:[#allocation0]]
  $region38: #{policy_ann_forward.1} parent=0
    _
  %s8 = ssub.s32 1, %s6
  %s9 = scalar_select 0, %s8, %s6
  $region1: #{policy_ann_forward.1} parent=0
    #allocation2 [shape = 'u8[32768]{0}', space=vmem, size = 0x8000, scoped, tag = 'input window, operand 2, single buffered']
    #allocation3 [shape = 's32[1]{0}', space=sflag, size = 0x4, scoped, tag = 'scoped memory for policy_ann_forward.1']
    #allocation4 [shape = 's32[1]{0}', space=sflag, size = 0x4, scoped, tag = 'scoped memory for policy_ann_forward.1']
    #allocation5 [shape = 'u8[2048]{0}', space=vmem, size = 0x800, scoped, tag = 'input window, operand 3, single buffered']
    #allocation6 [shape = 's32[1]{0}', space=sflag, size = 0x4, scoped, tag = 'scoped memory for policy_ann_forward.1']
    #allocation7 [shape = 'u8[2048]{0}', space=vmem, size = 0x800, scoped, tag = 'output window, operand 0, single buffered']
    %10 = vsyncpa [#allocation3], 0
    %11 = vsyncpa [#allocation6], 0
    %12 = vsyncpa [#allocation4], 0
    // Predicated region
    $region2: #{policy_ann_forward.1} parent=1 // pred_check
      _
    $region3: #{policy_ann_forward.1} parent=1 // pred_check_branch
      %14 = sbr.rel (0) target = $region5
    $region4: #{policy_ann_forward.1} parent=1 // pred_region
      _
    $region5: #{policy_ann_forward.1} parent=1 // pred_fallthru
      _
    // Predicated region
    $region6: #{policy_ann_forward.1} parent=1 // pred_check
      _
    $region7: #{policy_ann_forward.1} parent=1 // pred_check_branch
      %16 = sbr.rel (0) target = $region9
    $region8: #{policy_ann_forward.1} parent=1 // pred_region
      _
    $region9: #{policy_ann_forward.1} parent=1 // pred_fallthru
      _
    // Predicated region
    $region10: #{policy_ann_forward.1} parent=1 // pred_check
      _
    $region11: #{policy_ann_forward.1} parent=1 // pred_check_branch
      %18 = sbr.rel (0) target = $region13
    $region12: #{policy_ann_forward.1} parent=1 // pred_region
      %20 = vsyncadd [#allocation3], 0
      %s21 = sshll.u32 %s2, 4
      %s22 = int_to_ptr.hbm [resolvable:$true] %s21
      %s23 = sshll.u32 [#allocation2], 4
      %s24 = int_to_ptr.vmem [resolvable:$true] %s23
      %29 = dma.hbm_to_vmem [thread:$0]  %s22, 1024, %s24, [#allocation3], 128, 128, 8
    $region13: #{policy_ann_forward.1} parent=1 // pred_fallthru
      _
    // Predicated region
    $region14: #{policy_ann_forward.1} parent=1 // pred_check
      _
    $region15: #{policy_ann_forward.1} parent=1 // pred_check_branch
      %31 = sbr.rel (0) target = $region17
    $region16: #{policy_ann_forward.1} parent=1 // pred_region
      %33 = vsyncadd [#allocation6], 0
      %s35 = sshll.u32 %s3, 4
      %s36 = int_to_ptr.hbm [resolvable:$true] %s35
      %s37 = sshll.u32 [#allocation5], 4
      %s38 = int_to_ptr.vmem [resolvable:$true] %s37
      %40 = dma.hbm_to_vmem [thread:$0]  %s36, 64, %s38, [#allocation6]
    $region17: #{policy_ann_forward.1} parent=1 // pred_fallthru
      _
    // Predicated region
    $region18: #{policy_ann_forward.1} parent=1 // pred_check
      _
    $region19: #{policy_ann_forward.1} parent=1 // pred_check_branch
      %42 = sbr.rel (0) target = $region21
    $region20: #{policy_ann_forward.1} parent=1 // pred_region
      _
    $region21: #{policy_ann_forward.1} parent=1 // pred_fallthru
      _
    // Predicated region
    $region22: #{policy_ann_forward.1} parent=1 // pred_check
      _
    $region23: #{policy_ann_forward.1} parent=1 // pred_check_branch
      %44 = sbr.rel (0) target = $region25
    $region24: #{policy_ann_forward.1} parent=1 // pred_region
      %46 = dma.done [#allocation3], 1024
    $region25: #{policy_ann_forward.1} parent=1 // pred_fallthru
      _
    // Predicated region
    $region26: #{policy_ann_forward.1} parent=1 // pred_check
      _
    $region27: #{policy_ann_forward.1} parent=1 // pred_check_branch
      %48 = sbr.rel (0) target = $region29
    $region28: #{policy_ann_forward.1} parent=1 // pred_region
      %50 = dma.done [#allocation6], 64
    $region29: #{policy_ann_forward.1} parent=1 // pred_fallthru
      _
    %v51 = vld [vmem:[%s4] sm:$0xff]
    %v52 = vld [vmem:[%s4 + $0x8] sm:$0xff]
    %v53 = vld [vmem:[%s1] sm:$0xff]
    %v54 = vld [vmem:[%s1 + $0x8] sm:$0xff]
    %v55 = vld [vmem:[%s0] sm:$0xff]
    %57 = vset.pattern.permute.xlu0 0
    %58 = vperm.xlu0 %57, %v51
    %v59 = vpop.permute.xlu0 %58
    %62 = vset.pattern.permute.xlu0 0
    %63 = vperm.xlu0 %62, %v52
    %v64 = vpop.permute.xlu0 %63
    %vm66 = vcmask 97280
    %v68 = vsel %vm66, %v53, 0
    %v71 = vsel %vm66, %v54, 0
    %v74 = vsel %vm66, %v55, 0
    %76 = vmatpush.xpose.msra.mxu0 0.0
    %77 = vmatpush.xpose.msra.mxu0 0.0
    %78 = vmatpush.xpose.msra.mxu0 0.0
    %79 = vmatpush.xpose.msra.mxu0 0.0
    %80 = vmatpush.xpose.msra.mxu0 0.0
    %81 = vmatpush.xpose.msra.mxu0 0.0
    %82 = vmatpush.xpose.msra.mxu0 0.0
    %83 = vmatpush.xpose.msra.mxu0 0.0
    %84 = vmatpush.xpose.msra.mxu0 0.0
    %85 = vmatpush.xpose.msra.mxu0 0.0
    %86 = vmatpush.xpose.msra.mxu0 0.0
    %87 = vmatpush.xpose.msra.mxu0 0.0
    %88 = vmatpush.xpose.msra.mxu0 0.0
    %89 = vmatpush.xpose.msra.mxu0 0.0
    %90 = vmatpush.xpose.msra.mxu0 0.0
    %91 = vmatpush.xpose.msra.mxu0 %v74
    %92 = vmatmul.f32.gmra.mxu0 %v68
    %v93 = vpop.f32.mrf.mxu0
    %v94 = vadd.f32 %v59, %v93
    %95 = vmatmul.f32.gmra.mxu0 %v71
    %v96 = vpop.f32.mrf.mxu0
    %v97 = vadd.f32 %v64, %v96
    %98 = vdwg.mxu0
    %v99 = vmul.f32 %v94, 0.5
    %v100 = vmul.f32 %v97, 0.5
    %v101 = vtanh.pop %v99
    %v102 = vtanh.pop %v100
    %v103 = vadd.f32 %v101, 1.0
    %v104 = vadd.f32 %v102, 1.0
    %v105 = vmul.f32 %v103, 0.5
    %v106 = vmul.f32 %v104, 0.5
    %v107 = vmul.f32 %v94, %v105
    %v108 = vmul.f32 %v97, %v106
    %v109 = vld [vmem:[#allocation2] sm:$0xff]
    %v110 = vld [vmem:[#allocation2 + $0x8] sm:$0xff]
    %111 = vset.pattern.permute.xlu0 1
    %112 = vperm.xlu0 %111, %v51
    %v113 = vpop.permute.xlu0 %112
    %115 = vset.pattern.permute.xlu0 1
    %116 = vperm.xlu0 %115, %v52
    %v117 = vpop.permute.xlu0 %116
    %vm119 = vcmask 130048
    %v121 = vsel %vm119, %v109, 0
    %v124 = vsel %vm119, %v110, 0
    %126 = vmatpush.msra.mxu0 0.0
    %127 = vmatpush.msra.mxu0 0.0
    %128 = vmatpush.msra.mxu0 0.0
    %129 = vmatpush.msra.mxu0 0.0
    %130 = vmatpush.msra.mxu0 0.0
    %131 = vmatpush.msra.mxu0 0.0
    %132 = vmatpush.msra.mxu0 0.0
    %133 = vmatpush.msra.mxu0 0.0
    %134 = vmatpush.msra.mxu0 0.0
    %135 = vmatpush.msra.mxu0 0.0
    %136 = vmatpush.msra.mxu0 0.0
    %137 = vmatpush.msra.mxu0 0.0
    %138 = vmatpush.msra.mxu0 0.0
    %139 = vmatpush.msra.mxu0 0.0
    %140 = vmatpush.msra.mxu0 %v108
    %141 = vmatpush.msra.mxu0 %v107
    %142 = vmatmul.f32.gmra.mxu0 %v121
    %v143 = vpop.f32.mrf.mxu0
    %v144 = vadd.f32 %v113, %v143
    %145 = vmatmul.f32.gmra.mxu0 %v124
    %v146 = vpop.f32.mrf.mxu0
    %v147 = vadd.f32 %v117, %v146
    %148 = vdwg.mxu0
    %v149 = vmul.f32 %v144, 0.5
    %v150 = vmul.f32 %v147, 0.5
    %v151 = vtanh.pop %v149
    %v152 = vtanh.pop %v150
    %v153 = vadd.f32 %v151, 1.0
    %v154 = vadd.f32 %v152, 1.0
    %v155 = vmul.f32 %v153, 0.5
    %v156 = vmul.f32 %v154, 0.5
    %v157 = vmul.f32 %v144, %v155
    %v158 = vmul.f32 %v147, %v156
    %s159 = scalar_lea.vmem [#allocation2], 16
    %v160 = vld [vmem:[%s159] sm:$0xff]
    %v161 = vld [vmem:[%s159 + $0x8] sm:$0xff]
    %162 = vset.pattern.permute.xlu0 2
    %163 = vperm.xlu0 %162, %v51
    %v164 = vpop.permute.xlu0 %163
    %166 = vset.pattern.permute.xlu0 2
    %167 = vperm.xlu0 %166, %v52
    %v168 = vpop.permute.xlu0 %167
    %v171 = vsel %vm119, %v160, 0
    %v174 = vsel %vm119, %v161, 0
    %176 = vmatpush.msra.mxu0 0.0
    %177 = vmatpush.msra.mxu0 0.0
    %178 = vmatpush.msra.mxu0 0.0
    %179 = vmatpush.msra.mxu0 0.0
    %180 = vmatpush.msra.mxu0 0.0
    %181 = vmatpush.msra.mxu0 0.0
    %182 = vmatpush.msra.mxu0 0.0
    %183 = vmatpush.msra.mxu0 0.0
    %184 = vmatpush.msra.mxu0 0.0
    %185 = vmatpush.msra.mxu0 0.0
    %186 = vmatpush.msra.mxu0 0.0
    %187 = vmatpush.msra.mxu0 0.0
    %188 = vmatpush.msra.mxu0 0.0
    %189 = vmatpush.msra.mxu0 0.0
    %190 = vmatpush.msra.mxu0 %v158
    %191 = vmatpush.msra.mxu0 %v157
    %192 = vmatmul.f32.gmra.mxu0 %v171
    %v193 = vpop.f32.mrf.mxu0
    %v194 = vadd.f32 %v164, %v193
    %195 = vmatmul.f32.gmra.mxu0 %v174
    %v196 = vpop.f32.mrf.mxu0
    %v197 = vadd.f32 %v168, %v196
    %198 = vdwg.mxu0
    %v199 = vmul.f32 %v194, 0.5
    %v200 = vmul.f32 %v197, 0.5
    %v201 = vtanh.pop %v199
    %v202 = vtanh.pop %v200
    %v203 = vadd.f32 %v201, 1.0
    %v204 = vadd.f32 %v202, 1.0
    %v205 = vmul.f32 %v203, 0.5
    %v206 = vmul.f32 %v204, 0.5
    %v207 = vmul.f32 %v194, %v205
    %v208 = vmul.f32 %v197, %v206
    %s209 = scalar_lea.vmem [#allocation2], 32
    %v210 = vld [vmem:[%s209] sm:$0xff]
    %v211 = vld [vmem:[%s209 + $0x8] sm:$0xff]
    %212 = vset.pattern.permute.xlu0 3
    %213 = vperm.xlu0 %212, %v51
    %v214 = vpop.permute.xlu0 %213
    %216 = vset.pattern.permute.xlu0 3
    %217 = vperm.xlu0 %216, %v52
    %v218 = vpop.permute.xlu0 %217
    %v221 = vsel %vm119, %v210, 0
    %v224 = vsel %vm119, %v211, 0
    %226 = vmatpush.msra.mxu0 0.0
    %227 = vmatpush.msra.mxu0 0.0
    %228 = vmatpush.msra.mxu0 0.0
    %229 = vmatpush.msra.mxu0 0.0
    %230 = vmatpush.msra.mxu0 0.0
    %231 = vmatpush.msra.mxu0 0.0
    %232 = vmatpush.msra.mxu0 0.0
    %233 = vmatpush.msra.mxu0 0.0
    %234 = vmatpush.msra.mxu0 0.0
    %235 = vmatpush.msra.mxu0 0.0
    %236 = vmatpush.msra.mxu0 0.0
    %237 = vmatpush.msra.mxu0 0.0
    %238 = vmatpush.msra.mxu0 0.0
    %239 = vmatpush.msra.mxu0 0.0
    %240 = vmatpush.msra.mxu0 %v208
    %241 = vmatpush.msra.mxu0 %v207
    %242 = vmatmul.f32.gmra.mxu0 %v221
    %v243 = vpop.f32.mrf.mxu0
    %v244 = vadd.f32 %v214, %v243
    %245 = vmatmul.f32.gmra.mxu0 %v224
    %v246 = vpop.f32.mrf.mxu0
    %v247 = vadd.f32 %v218, %v246
    %248 = vdwg.mxu0
    %v249 = vmul.f32 %v244, 0.5
    %v250 = vmul.f32 %v247, 0.5
    %v251 = vtanh.pop %v249
    %v252 = vtanh.pop %v250
    %v253 = vadd.f32 %v251, 1.0
    %v254 = vadd.f32 %v252, 1.0
    %v255 = vmul.f32 %v253, 0.5
    %v256 = vmul.f32 %v254, 0.5
    %v257 = vmul.f32 %v244, %v255
    %v258 = vmul.f32 %v247, %v256
    %s259 = scalar_lea.vmem [#allocation2], 48
    %v260 = vld [vmem:[%s259] sm:$0xff]
    %v261 = vld [vmem:[%s259 + $0x8] sm:$0xff]
    %262 = vset.pattern.permute.xlu0 4
    %263 = vperm.xlu0 %262, %v51
    %v264 = vpop.permute.xlu0 %263
    %266 = vset.pattern.permute.xlu0 4
    %267 = vperm.xlu0 %266, %v52
    %v268 = vpop.permute.xlu0 %267
    %v271 = vsel %vm119, %v260, 0
    %v274 = vsel %vm119, %v261, 0
    %276 = vmatpush.msra.mxu0 0.0
    %277 = vmatpush.msra.mxu0 0.0
    %278 = vmatpush.msra.mxu0 0.0
    %279 = vmatpush.msra.mxu0 0.0
    %280 = vmatpush.msra.mxu0 0.0
    %281 = vmatpush.msra.mxu0 0.0
    %282 = vmatpush.msra.mxu0 0.0
    %283 = vmatpush.msra.mxu0 0.0
    %284 = vmatpush.msra.mxu0 0.0
    %285 = vmatpush.msra.mxu0 0.0
    %286 = vmatpush.msra.mxu0 0.0
    %287 = vmatpush.msra.mxu0 0.0
    %288 = vmatpush.msra.mxu0 0.0
    %289 = vmatpush.msra.mxu0 0.0
    %290 = vmatpush.msra.mxu0 %v258
    %291 = vmatpush.msra.mxu0 %v257
    %292 = vmatmul.f32.gmra.mxu0 %v271
    %v293 = vpop.f32.mrf.mxu0
    %v294 = vadd.f32 %v264, %v293
    %295 = vmatmul.f32.gmra.mxu0 %v274
    %v296 = vpop.f32.mrf.mxu0
    %v297 = vadd.f32 %v268, %v296
    %298 = vdwg.mxu0
    %v299 = vmul.f32 %v294, 0.5
    %v300 = vmul.f32 %v297, 0.5
    %v301 = vtanh.pop %v299
    %v302 = vtanh.pop %v300
    %v303 = vadd.f32 %v301, 1.0
    %v304 = vadd.f32 %v302, 1.0
    %v305 = vmul.f32 %v303, 0.5
    %v306 = vmul.f32 %v304, 0.5
    %v307 = vmul.f32 %v294, %v305
    %v308 = vmul.f32 %v297, %v306
    %v309 = vld [vmem:[#allocation5] sm:$0xf]
    %310 = vset.pattern.permute.xlu0 5
    %311 = vperm.xlu0 %310, %v51
    %v312 = vpop.permute.xlu0 %311
    %v315 = vsel %vm119, %v309, 0
    %317 = vmatpush.msra.mxu0 0.0
    %318 = vmatpush.msra.mxu0 0.0
    %319 = vmatpush.msra.mxu0 0.0
    %320 = vmatpush.msra.mxu0 0.0
    %321 = vmatpush.msra.mxu0 0.0
    %322 = vmatpush.msra.mxu0 0.0
    %323 = vmatpush.msra.mxu0 0.0
    %324 = vmatpush.msra.mxu0 0.0
    %325 = vmatpush.msra.mxu0 0.0
    %326 = vmatpush.msra.mxu0 0.0
    %327 = vmatpush.msra.mxu0 0.0
    %328 = vmatpush.msra.mxu0 0.0
    %329 = vmatpush.msra.mxu0 0.0
    %330 = vmatpush.msra.mxu0 0.0
    %331 = vmatpush.msra.mxu0 %v308
    %332 = vmatpush.msra.mxu0 %v307
    %333 = vmatmul.f32.gmra.mxu0 %v315
    %v334 = vpop.f32.mrf.mxu0
    %v335 = vadd.f32 %v312, %v334
    %336 = vdwg.mxu0
    %v338 = vrot.slane %v335, 1
    %v340 = vmax.f32 %v335, %v338
    %v341 = vrot.slane %v335, 2
    %v343 = vmax.f32 %v340, %v341
    %v344 = vrot.slane %v335, 3
    %v346 = vmax.f32 %v343, %v344
    %v347 = vperm.slane %v346, 0
    %v348 = vsub.f32 %v335, %v347
    %v349 = vmul.f32 %v348, 1.442695
    %v350 = vpow.pop %v349
    %v352 = vrot.slane %v350, 1
    %v354 = vadd.f32 %v350, %v352
    %v355 = vrot.slane %v350, 2
    %v357 = vadd.f32 %v354, %v355
    %v358 = vrot.slane %v350, 3
    %v360 = vadd.f32 %v357, %v358
    %v361 = vrcp.pop %v360
    %v362 = vmul.f32 %v360, %v361
    %v363 = vsub.f32 1.0, %v362
    %v364 = vmul.f32 %v361, %v363
    %v365 = vadd.f32 %v361, %v364
    %vm366 = vweird.f32 %v360
    %vm367 = vweird.f32 %v361
    %vm368 = vmor %vm366, %vm367
    %v369 = vsel %vm368, %v361, %v365
    %v370 = vand.u32 2147483647, %v360
    %vm371 = vcmp.eq.f32.partialorder %v370, 8.507059e+37
    %v372 = vand.u32 %v360, 2147483648
    %v373 = vor.u32 1.1754944e-38, %v372
    %v374 = vsel %vm371, %v373, %v369
    %v375 = vmul.f32 1.0, %v374
    %v376 = vperm.slane %v375, 0
    %v377 = vmul.f32 %v350, %v376
    %vm378 = vcmask 60416
    %379 = vst.msk [vmem:[#allocation7] sm:$0xf] %vm378, %v377
    // Predicated region
    $region30: #{policy_ann_forward.1} parent=1 // pred_check
      _
    $region31: #{policy_ann_forward.1} parent=1 // pred_check_branch
      %381 = sbr.rel (0) target = $region33
    $region32: #{policy_ann_forward.1} parent=1 // pred_region
      %383 = vsyncadd [#allocation4], 0
      %s385 = sshll.u32 [#allocation7], 4
      %s386 = int_to_ptr.vmem [resolvable:$true] %s385
      %s387 = sshll.u32 %s5, 4
      %s388 = int_to_ptr.hbm [resolvable:$true] %s387
      %390 = dma.vmem_to_hbm [thread:$0]  %s386, 64, %s388, [#allocation4]
    $region33: #{policy_ann_forward.1} parent=1 // pred_fallthru
      _
    // Predicated region
    $region34: #{policy_ann_forward.1} parent=1 // pred_check
      _
    $region35: #{policy_ann_forward.1} parent=1 // pred_check_branch
      %392 = sbr.rel (0) target = $region37
    $region36: #{policy_ann_forward.1} parent=1 // pred_region
      %394 = dma.done [#allocation4], 64
    $region37: #{policy_ann_forward.1} parent=1 // pred_fallthru
      _
    %395 = vsyncpa [#allocation3], 1
    %396 = vsyncpa [#allocation6], 1
    %397 = vsyncpa [#allocation4], 1

</llo_original>
